<compile_context>
chip_gen: v7x
topology: tpu7x:2x2x1
jax: 0.10.0
libtpu: 0.0.40
codegen_flags: <defaults>
</compile_context>

<pallas_src>
import functools

import numpy as np
import jax
import jax.numpy as jnp
from jax.experimental import pallas as pl
from jax.experimental.pallas import tpu as pltpu


def _round_up(n, m):
    return ((n + m - 1) // m) * m


def _mish(x):
    # mish(x) = x * tanh(softplus(x)).
    # With t = exp(x):  tanh(log(1+t)) = t*(t+2) / (t*(t+2) + 2).
    # Exact (no approx reciprocal).  Clamping the exp argument at 20 keeps it
    # finite; for x >= ~12 the ratio already rounds to exactly 1 in f32, so the
    # clamp does not change the result (mish(x) -> x for large x).
    t = jnp.exp(jnp.minimum(x, 20.0))
    num = t * (t + 2.0)
    return x * (num / (num + 2.0))


def _layout(state_dim, action_dim, hidden_dim):
    """Row offsets of each block inside the packed (rows, width) param slab."""
    width = _round_up(max(2 * hidden_dim, 2), 128)        # lane-dense width
    # layer-1 input columns: state | action | ones(bias) | zero pad  -> 8-aligned
    x_cols = _round_up(state_dim + action_dim + 1, 8)
    r_w1 = 0                                              # fused W1 (+ folded b1 row)
    r_w2 = x_cols                                         # block-diag layer 2
    r_w3 = r_w2 + width                                   # block-diag layer 3
    r_w4 = r_w3 + width                                   # head (q1->lane0, q2->lane1)
    r_b = r_w4 + width                                    # bias rows b2,b3,b4 (padded to 8)
    rows = r_b + 8
    return dict(width=width, x_cols=x_cols, r_w1=r_w1, r_w2=r_w2,
                r_w3=r_w3, r_w4=r_w4, r_b=r_b, rows=rows)


def critic_kernel(x_ref, w_ref, q_ref, *, lo):
    width = lo["width"]
    x_cols = lo["x_cols"]
    wdt = w_ref.dtype

    x = x_ref[...]

    # Bias rows (b2, b3, b4); b1 is folded into W1 via the ones column of x.
    b = w_ref[lo["r_b"]:lo["r_b"] + 8, :]

    # Layer 1: single aligned slab slice, bias already folded in.
    w1 = w_ref[lo["r_w1"]:lo["r_w1"] + x_cols, :]
    h = _mish(jnp.dot(x, w1, preferred_element_type=jnp.float32))

    # Layers 2 / 3: block-diagonal fused weights (one full-width matmul each).
    w2 = w_ref[lo["r_w2"]:lo["r_w2"] + width, :]
    h = _mish(jnp.dot(h.astype(wdt), w2, preferred_element_type=jnp.float32)
              + b[0:1, :])

    w3 = w_ref[lo["r_w3"]:lo["r_w3"] + width, :]
    h = _mish(jnp.dot(h.astype(wdt), w3, preferred_element_type=jnp.float32)
              + b[1:2, :])

    # Layer 4: q1 in lane 0, q2 in lane 1; single lane-dense unmasked store.
    w4 = w_ref[lo["r_w4"]:lo["r_w4"] + width, :]
    q = jnp.dot(h.astype(wdt), w4, preferred_element_type=jnp.float32) + b[2:3, :]
    q_ref[...] = q.astype(q_ref.dtype)


def init_mlp_params(key, d_in, hidden):
    """Deterministic init mimicking nn.Linear's U(-1/sqrt(fan_in), 1/sqrt(fan_in))."""
    dims = [(d_in, hidden), (hidden, hidden), (hidden, hidden), (hidden, 1)]
    params = []
    for (fi, fo) in dims:
        key, kw, kb = jax.random.split(key, 3)
        bound = 1.0 / np.sqrt(np.float32(fi))
        w = jax.random.uniform(kw, (fi, fo), jnp.float32, -bound, bound)
        b = jax.random.uniform(kb, (1, fo), jnp.float32, -bound, bound)
        params += [w, b]
    return params, key


def pack_critic_params(params_q1, params_q2, state_dim, action_dim, hidden_dim,
                       dtype=jnp.float32):
    """One-time host-side packing of both Q-nets into one padded slab.

    Use dtype=jnp.bfloat16 on v6e/v7x for training-size batches (halves slab
    DMA and feeds the MXU at its native bf16 rate); keep f32 on v5e / for
    tight-accuracy evaluation.
    """
    H = hidden_dim
    din = state_dim + action_dim
    lo = _layout(state_dim, action_dim, hidden_dim)
    slab = np.zeros((lo["rows"], lo["width"]), np.float32)

    def put(params, col0):
        w1, b1, w2, b2, w3, b3, w4, b4 = [np.asarray(p, np.float32) for p in params]
        hi = col0 + H
        out_col = 0 if col0 == 0 else 1
        # layer 1 weights + folded bias row (aligned to the wrapper's ones column)
        slab[lo["r_w1"]:lo["r_w1"] + din, col0:hi] = w1
        slab[lo["r_w1"] + din, col0:hi] = b1.reshape(-1)
        # layers 2 / 3 (block-diagonal)
        slab[lo["r_w2"] + col0:lo["r_w2"] + hi, col0:hi] = w2
        slab[lo["r_w3"] + col0:lo["r_w3"] + hi, col0:hi] = w3
        # layer 4 (q1 -> lane 0, q2 -> lane 1)
        slab[lo["r_w4"] + col0:lo["r_w4"] + hi, out_col:out_col + 1] = w4
        # biases b2, b3 (broadcast rows) and b4 (scalar in its output lane)
        slab[lo["r_b"] + 0, col0:hi] = b2.reshape(-1)
        slab[lo["r_b"] + 1, col0:hi] = b3.reshape(-1)
        slab[lo["r_b"] + 2, out_col] = float(b4.reshape(-1)[0])

    put(params_q1, 0)
    put(params_q2, H)
    return jnp.asarray(slab, dtype)


def critic_forward(state, action, packed, hidden_dim, *, batch_tile=512):
    """Returns (q1, q2), each (batch, 1) float32."""
    batch, sd = state.shape
    ad = action.shape[1]
    lo = _layout(sd, ad, hidden_dim)
    x_cols, width = lo["x_cols"], lo["width"]
    cdt = packed.dtype  # compute dtype for the matmul inputs (f32 or bf16)

    # Pack [state | action | 1 | 0-pad] once in the wrapper: layer-1 becomes a
    # single aligned dot and b1 is folded via the ones column.
    parts = [state.astype(cdt), action.astype(cdt), jnp.ones((batch, 1), cdt)]
    pad_cols = x_cols - (sd + ad + 1)
    if pad_cols:
        parts.append(jnp.zeros((batch, pad_cols), cdt))
    x = jnp.concatenate(parts, axis=-1)

    # Batch tiling: single full-array step for small batches; otherwise tile
    # the batch axis (parallel semantics -> both v7x TensorCores) with the
    # weight slab held VMEM-resident across steps (constant index_map).
    if batch <= batch_tile:
        tb = batch
        padded_batch = batch
    else:
        tb = _round_up(batch_tile, 8)
        padded_batch = _round_up(batch, tb)
        if padded_batch != batch:
            x = jnp.pad(x, ((0, padded_batch - batch), (0, 0)))
    grid = (padded_batch // tb,)

    kernel = functools.partial(critic_kernel, lo=lo)
    out = pl.pallas_call(
        kernel,
        out_shape=jax.ShapeDtypeStruct((padded_batch, width), jnp.float32),
        grid_spec=pltpu.PrefetchScalarGridSpec(
            num_scalar_prefetch=0,
            grid=grid,
            in_specs=[
                pl.BlockSpec((tb, x_cols), lambda i: (i, 0)),
                pl.BlockSpec((lo["rows"], width), lambda i: (0, 0)),
            ],
            out_specs=pl.BlockSpec((tb, width), lambda i: (i, 0)),
        ),
        compiler_params=pltpu.CompilerParams(
            dimension_semantics=("parallel",)),
    )(x, packed)

    out = out[:batch]
    # q1 / q2 live in lanes 0 / 1 of the lane-dense output slab.  If the
    # consumer is itself a Pallas kernel (TD error / GAN loss), pass `out`
    # through unsliced instead to avoid an extra strided HBM round-trip.
    return out[:, 0:1], out[:, 1:2]


def critic_reference(state, action, params_q1, params_q2):
    """Pure-JAX reference (exact Mish, highest-precision matmuls)."""
    x = jnp.concatenate([state, action], axis=-1).astype(jnp.float32)
    hp = jax.lax.Precision.HIGHEST

    def mlp(p):
        w1, b1, w2, b2, w3, b3, w4, b4 = p
        h = x
        for w, b in [(w1, b1), (w2, b2), (w3, b3)]:
            z = jnp.dot(h, w, precision=hp) + b
            h = z * jnp.tanh(jax.nn.softplus(z))
        return jnp.dot(h, w4, precision=hp) + b4

    return mlp(params_q1), mlp(params_q2)


if __name__ == "__main__":
    key = jax.random.PRNGKey(0)

    batch = 8
    state_dim = 12
    action_dim = 4
    hidden_dim = 32

    key, ks, ka = jax.random.split(key, 3)
    state = jax.random.normal(ks, (batch, state_dim), jnp.float32)
    action = jax.random.normal(ka, (batch, action_dim), jnp.float32)

    params_q1, key = init_mlp_params(key, state_dim + action_dim, hidden_dim)
    params_q2, key = init_mlp_params(key, state_dim + action_dim, hidden_dim)

    # One-time packing at init (not per forward call).
    packed = pack_critic_params(params_q1, params_q2,
                                state_dim, action_dim, hidden_dim)

    q1, q2 = critic_forward(state, action, packed, hidden_dim)
    q1 = jax.block_until_ready(q1)
    q2 = jax.block_until_ready(q2)

    r1, r2 = critic_reference(state, action, params_q1, params_q2)
    assert q1.shape == (batch, 1) and q2.shape == (batch, 1)
    # Mish is now exact (no approx reciprocal); remaining drift is only
    # f32-matmul pass differences between XLA and Mosaic.
    assert jnp.allclose(q1, r1, atol=5e-3, rtol=5e-3)
    assert jnp.allclose(q2, r2, atol=5e-3, rtol=5e-3)

    print("KERNEL_OK")
</pallas_src>

<mosaic_0001>
module attributes {stable_mosaic.version = 11 : i64} {
  func.func @critic_kernel(%arg0: i32, %arg1: memref<8x24xf32, #tpu.memory_space<vmem>>, %arg2: memref<416x128xf32, #tpu.memory_space<vmem>>, %arg3: memref<8x128xf32, #tpu.memory_space<vmem>>) attributes {dimension_semantics = [#tpu.dimension_semantics<parallel>], iteration_bounds = array<i64: 1>, scalar_prefetch = 0 : i64, scratch_operands = 0 : i64, tpu.core_type = #tpu.core_type<tc>, window_params = [{transform_indices = @transform_0, window_bounds = array<i64: 8, 24>}, {pipeline_mode = #tpu.pipeline_mode<synchronous>, transform_indices = @transform_1, window_bounds = array<i64: 416, 128>}, {transform_indices = @transform_2, window_bounds = array<i64: 8, 128>}]} {
    %c0 = arith.constant 0 : index
    %c0_0 = arith.constant 0 : index
    %0 = vector.load %arg1[%c0, %c0_0] : memref<8x24xf32, #tpu.memory_space<vmem>>, vector<8x24xf32>
    %c408 = arith.constant 408 : index
    %c0_1 = arith.constant 0 : index
    %1 = vector.load %arg2[%c408, %c0_1] : memref<416x128xf32, #tpu.memory_space<vmem>>, vector<8x128xf32>
    %c0_2 = arith.constant 0 : index
    %c0_3 = arith.constant 0 : index
    %2 = vector.load %arg2[%c0_2, %c0_3] : memref<416x128xf32, #tpu.memory_space<vmem>>, vector<24x128xf32>
    %cst = arith.constant dense<0.000000e+00> : vector<8x128xf32>
    %3 = tpu.matmul %0, %2, %cst {dimension_numbers = #tpu.dot_dimension_numbers<[1], [0], [0], [1], [0, 0, 1, 1], [], []>} : vector<8x24xf32>, vector<24x128xf32>, vector<8x128xf32> -> vector<8x128xf32>
    %cst_4 = arith.constant 2.000000e+01 : f32
    %4 = vector.broadcast %cst_4 : f32 to vector<8x128xf32>
    %5 = arith.minimumf %3, %4 : vector<8x128xf32>
    %6 = math.exp %5 : vector<8x128xf32>
    %cst_5 = arith.constant 2.000000e+00 : f32
    %7 = vector.broadcast %cst_5 : f32 to vector<8x128xf32>
    %8 = arith.addf %6, %7 : vector<8x128xf32>
    %9 = arith.mulf %6, %8 : vector<8x128xf32>
    %cst_6 = arith.constant 2.000000e+00 : f32
    %10 = vector.broadcast %cst_6 : f32 to vector<8x128xf32>
    %11 = arith.addf %9, %10 : vector<8x128xf32>
    %12 = arith.divf %9, %11 : vector<8x128xf32>
    %13 = arith.mulf %3, %12 : vector<8x128xf32>
    %c24 = arith.constant 24 : index
    %c0_7 = arith.constant 0 : index
    %14 = vector.load %arg2[%c24, %c0_7] : memref<416x128xf32, #tpu.memory_space<vmem>>, vector<128x128xf32>
    %cst_8 = arith.constant dense<0.000000e+00> : vector<8x128xf32>
    %15 = tpu.matmul %13, %14, %cst_8 {dimension_numbers = #tpu.dot_dimension_numbers<[1], [0], [0], [1], [0, 0, 1, 1], [], []>} : vector<8x128xf32>, vector<128x128xf32>, vector<8x128xf32> -> vector<8x128xf32>
    %16 = vector.extract_strided_slice %1 {offsets = [0, 0], sizes = [1, 128], strides = [1, 1]} : vector<8x128xf32> to vector<1x128xf32>
    %17 = vector.broadcast %16 : vector<1x128xf32> to vector<8x128xf32>
    %18 = arith.addf %15, %17 : vector<8x128xf32>
    %cst_9 = arith.constant 2.000000e+01 : f32
    %19 = vector.broadcast %cst_9 : f32 to vector<8x128xf32>
    %20 = arith.minimumf %18, %19 : vector<8x128xf32>
    %21 = math.exp %20 : vector<8x128xf32>
    %cst_10 = arith.constant 2.000000e+00 : f32
    %22 = vector.broadcast %cst_10 : f32 to vector<8x128xf32>
    %23 = arith.addf %21, %22 : vector<8x128xf32>
    %24 = arith.mulf %21, %23 : vector<8x128xf32>
    %cst_11 = arith.constant 2.000000e+00 : f32
    %25 = vector.broadcast %cst_11 : f32 to vector<8x128xf32>
    %26 = arith.addf %24, %25 : vector<8x128xf32>
    %27 = arith.divf %24, %26 : vector<8x128xf32>
    %28 = arith.mulf %18, %27 : vector<8x128xf32>
    %c152 = arith.constant 152 : index
    %c0_12 = arith.constant 0 : index
    %29 = vector.load %arg2[%c152, %c0_12] : memref<416x128xf32, #tpu.memory_space<vmem>>, vector<128x128xf32>
    %cst_13 = arith.constant dense<0.000000e+00> : vector<8x128xf32>
    %30 = tpu.matmul %28, %29, %cst_13 {dimension_numbers = #tpu.dot_dimension_numbers<[1], [0], [0], [1], [0, 0, 1, 1], [], []>} : vector<8x128xf32>, vector<128x128xf32>, vector<8x128xf32> -> vector<8x128xf32>
    %31 = vector.extract_strided_slice %1 {offsets = [1, 0], sizes = [1, 128], strides = [1, 1]} : vector<8x128xf32> to vector<1x128xf32>
    %32 = vector.broadcast %31 : vector<1x128xf32> to vector<8x128xf32>
    %33 = arith.addf %30, %32 : vector<8x128xf32>
    %cst_14 = arith.constant 2.000000e+01 : f32
    %34 = vector.broadcast %cst_14 : f32 to vector<8x128xf32>
    %35 = arith.minimumf %33, %34 : vector<8x128xf32>
    %36 = math.exp %35 : vector<8x128xf32>
    %cst_15 = arith.constant 2.000000e+00 : f32
    %37 = vector.broadcast %cst_15 : f32 to vector<8x128xf32>
    %38 = arith.addf %36, %37 : vector<8x128xf32>
    %39 = arith.mulf %36, %38 : vector<8x128xf32>
    %cst_16 = arith.constant 2.000000e+00 : f32
    %40 = vector.broadcast %cst_16 : f32 to vector<8x128xf32>
    %41 = arith.addf %39, %40 : vector<8x128xf32>
    %42 = arith.divf %39, %41 : vector<8x128xf32>
    %43 = arith.mulf %33, %42 : vector<8x128xf32>
    %c280 = arith.constant 280 : index
    %c0_17 = arith.constant 0 : index
    %44 = vector.load %arg2[%c280, %c0_17] : memref<416x128xf32, #tpu.memory_space<vmem>>, vector<128x128xf32>
    %cst_18 = arith.constant dense<0.000000e+00> : vector<8x128xf32>
    %45 = tpu.matmul %43, %44, %cst_18 {dimension_numbers = #tpu.dot_dimension_numbers<[1], [0], [0], [1], [0, 0, 1, 1], [], []>} : vector<8x128xf32>, vector<128x128xf32>, vector<8x128xf32> -> vector<8x128xf32>
    %46 = vector.extract_strided_slice %1 {offsets = [2, 0], sizes = [1, 128], strides = [1, 1]} : vector<8x128xf32> to vector<1x128xf32>
    %47 = vector.broadcast %46 : vector<1x128xf32> to vector<8x128xf32>
    %48 = arith.addf %45, %47 : vector<8x128xf32>
    %c0_19 = arith.constant 0 : index
    %c0_20 = arith.constant 0 : index
    %49 = vector.load %arg3[%c0_19, %c0_20] : memref<8x128xf32, #tpu.memory_space<vmem>>, vector<8x128xf32>
    tpu.vector_store %arg3[%c0_19, %c0_20], %48 {strides = array<i32>} : memref<8x128xf32, #tpu.memory_space<vmem>>, vector<8x128xf32>,
    return
  }
  func.func @transform_0(%arg0: i32) -> (i32, i32) {
    %c0_i32 = arith.constant 0 : i32
    %c0_i32_0 = arith.constant 0 : i32
    return %arg0, %c0_i32 : i32, i32
  }
  func.func @transform_1(%arg0: i32) -> (i32, i32) {
    %c0_i32 = arith.constant 0 : i32
    %c0_i32_0 = arith.constant 0 : i32
    %c0_i32_1 = arith.constant 0 : i32
    return %c0_i32, %c0_i32_0 : i32, i32
  }
  func.func @transform_2(%arg0: i32) -> (i32, i32) {
    %c0_i32 = arith.constant 0 : i32
    %c0_i32_0 = arith.constant 0 : i32
    return %arg0, %c0_i32 : i32, i32
  }
}

</mosaic_0001>

<llo_original>
// kernel: tpu_custom_call.1
$region0: #{tpu_custom_call.1}
  #allocation0 [shape = 'u32[]', space=smem, size = 0x4, offset = 0x4, fixed_abs, tag = 'smem constant byte address 0x4 - core index']
  #allocation1 [shape = 'u32[144,128]{1,0:T(1,128)}', space=vmem, size = 0x12000, scoped, tag = 'internal scratch']
  %s0 = inlined_call_operand.hbm [shape: f32[8,24], index: 0, kind: input, shape index: {}]
  %s1 = inlined_call_operand.hbm [shape: f32[416,128], index: 1, kind: input, shape index: {}]
  %s2 = inlined_call_operand.hbm [shape: f32[8,128], index: 2, kind: output, shape index: {}]
  %s3 = sld [smem:[#allocation0]]
  $region26: #{tpu_custom_call.1} parent=0
    _
  %s5 = ssub.s32 1, %s3
  %s6 = scalar_select 0, %s5, %s3
  $region1: #{tpu_custom_call.1} parent=0
    #allocation2 [shape = 'u8[4096]{0}', space=vmem, size = 0x1000, scoped, tag = 'input window, operand 0, single buffered']
    #allocation3 [shape = 's32[1]{0}', space=sflag, size = 0x4, scoped, tag = 'scoped memory for tpu_custom_call.1']
    #allocation4 [shape = 's32[1]{0}', space=sflag, size = 0x4, scoped, tag = 'scoped memory for tpu_custom_call.1']
    #allocation5 [shape = 'u8[212992]{0}', space=vmem, size = 0x34000, scoped, tag = 'input window, operand 1, single buffered']
    #allocation6 [shape = 's32[1]{0}', space=sflag, size = 0x4, scoped, tag = 'scoped memory for tpu_custom_call.1']
    #allocation7 [shape = 'u8[4096]{0}', space=vmem, size = 0x1000, scoped, tag = 'output window, operand 0, single buffered']
    %7 = vsyncpa [#allocation3], 0
    %8 = vsyncpa [#allocation6], 0
    %9 = vsyncpa [#allocation4], 0
    // Predicated region
    $region2: #{tpu_custom_call.1} parent=1 // pred_check
      _
    $region3: #{tpu_custom_call.1} parent=1 // pred_check_branch
      %11 = sbr.rel (0) target = $region5
    $region4: #{tpu_custom_call.1} parent=1 // pred_region
      %s13 = ssub.s32 128, 128
      %14 = vsyncadd [#allocation3], %s13
      %s16 = sshll.u32 [#allocation2], 4
      %s17 = int_to_ptr.vmem [resolvable:$true] %s16
      %19 = dma.hbm_to_vmem [thread:$0]  %s0, 128, %s17, [#allocation3]
    $region5: #{tpu_custom_call.1} parent=1 // pred_fallthru
      _
    // Predicated region
    $region6: #{tpu_custom_call.1} parent=1 // pred_check
      _
    $region7: #{tpu_custom_call.1} parent=1 // pred_check_branch
      %21 = sbr.rel (0) target = $region9
    $region8: #{tpu_custom_call.1} parent=1 // pred_region
      %s23 = ssub.s32 6656, 6656
      %24 = vsyncadd [#allocation6], %s23
      %s25 = sshll.u32 [#allocation5], 4
      %s26 = int_to_ptr.vmem [resolvable:$true] %s25
      %31 = dma.hbm_to_vmem [thread:$0]  %s1, 6656, %s26, [#allocation6], 128, 128, 8
    $region9: #{tpu_custom_call.1} parent=1 // pred_fallthru
      _
    // Predicated region
    $region10: #{tpu_custom_call.1} parent=1 // pred_check
      _
    $region11: #{tpu_custom_call.1} parent=1 // pred_check_branch
      %33 = sbr.rel (0) target = $region13
    $region12: #{tpu_custom_call.1} parent=1 // pred_region
      %34 = dma.done [#allocation3], 128
    $region13: #{tpu_custom_call.1} parent=1 // pred_fallthru
      _
    // Predicated region
    $region14: #{tpu_custom_call.1} parent=1 // pred_check
      _
    $region15: #{tpu_custom_call.1} parent=1 // pred_check_branch
      %36 = sbr.rel (0) target = $region17
    $region16: #{tpu_custom_call.1} parent=1 // pred_region
      %37 = dma.done [#allocation6], 6656
    $region17: #{tpu_custom_call.1} parent=1 // pred_fallthru
      _
    %v38 = vld [vmem:[#allocation2] sm:$0xff]
    %v39 = vld [vmem:[#allocation5 + $0x198] sm:$0xff]
    %v40 = vld [vmem:[#allocation5] sm:$0xff]
    %v41 = vld [vmem:[#allocation5 + $0x8] sm:$0xff]
    %v42 = vld [vmem:[#allocation5 + $0x10] sm:$0xff]
    %vm43 = vcmask 195584
    %v45 = vsel %vm43, %v38, 0
    %47 = vmatprep.subr.mxu0 0.0
    %48 = vmatpush1.msra.mxu0 %v40
    %49 = vmatprep.subr.mxu0 0.0
    %50 = vmatpush1.msra.mxu0 %v41
    %51 = vmatprep.subr.mxu0 0.0
    %52 = vmatpush1.msra.mxu0 %v42
    %53 = vmatprep.subr.mxu0 0.0
    %54 = vmatpush1.msra.mxu0 0.0
    %55 = vmatprep.subr.mxu0 0.0
    %56 = vmatpush1.msra.mxu0 0.0
    %57 = vmatprep.subr.mxu0 0.0
    %58 = vmatpush1.msra.mxu0 0.0
    %59 = vmatprep.subr.mxu0 0.0
    %60 = vmatpush1.msra.mxu0 0.0
    %61 = vmatprep.subr.mxu0 0.0
    %62 = vmatpush1.msra.mxu0 0.0
    %63 = vmatprep.subr.mxu0 0.0
    %64 = vmatpush1.msra.mxu0 0.0
    %65 = vmatprep.subr.mxu0 0.0
    %66 = vmatpush1.msra.mxu0 0.0
    %67 = vmatprep.subr.mxu0 0.0
    %68 = vmatpush1.msra.mxu0 0.0
    %69 = vmatprep.subr.mxu0 0.0
    %70 = vmatpush1.msra.mxu0 0.0
    %71 = vmatprep.subr.mxu0 0.0
    %72 = vmatpush1.msra.mxu0 0.0
    %73 = vmatprep.subr.mxu0 0.0
    %74 = vmatpush1.msra.mxu0 0.0
    %75 = vmatprep.subr.mxu0 0.0
    %76 = vmatpush1.msra.mxu0 0.0
    %77 = vmatprep.subr.mxu0 0.0
    %78 = vmatpush1.msra.mxu0 0.0
    %79 = vmatprep.subr.mxu0 0.0
    %80 = vmatpush1.msra.mxu0 0.0
    %81 = vmatprep.subr.mxu0 0.0
    %82 = vmatpush1.msra.mxu0 0.0
    %83 = vmatprep.subr.mxu0 0.0
    %84 = vmatpush1.msra.mxu0 0.0
    %85 = vmatprep.subr.mxu0 0.0
    %86 = vmatpush1.msra.mxu0 0.0
    %87 = vmatprep.subr.mxu0 0.0
    %88 = vmatpush1.msra.mxu0 0.0
    %89 = vmatprep.subr.mxu0 0.0
    %90 = vmatpush1.msra.mxu0 0.0
    %91 = vmatprep.subr.mxu0 0.0
    %92 = vmatpush1.msra.mxu0 0.0
    %93 = vmatprep.subr.mxu0 0.0
    %94 = vmatpush1.msra.mxu0 0.0
    %95 = vmatprep.subr.mxu0 0.0
    %96 = vmatpush1.msra.mxu0 0.0
    %97 = vmatprep.subr.mxu0 0.0
    %98 = vmatpush1.msra.mxu0 0.0
    %99 = vmatprep.subr.mxu0 0.0
    %100 = vmatpush1.msra.mxu0 0.0
    %101 = vmatprep.subr.mxu0 0.0
    %102 = vmatpush1.msra.mxu0 0.0
    %103 = vmatprep.subr.mxu0 0.0
    %104 = vmatpush1.msra.mxu0 0.0
    %105 = vmatprep.subr.mxu0 0.0
    %106 = vmatpush1.msra.mxu0 0.0
    %107 = vmatprep.subr.mxu0 0.0
    %108 = vmatpush1.msra.mxu0 0.0
    %109 = vmatprep.subr.mxu0 0.0
    %110 = vmatpush1.msra.mxu0 0.0
    %111 = vmatprep.mubr.f32.mxu0 0.0
    %112 = vmatmul.mubr.f32.gmra.mrb[0].mxu0 %v45
    %v113 = vpop.f32.mrb[0].mxu0
    %v114 = vadd.f32 0.0, %v113
    %v115 = vpop.f32.mrb[0].mxu0
    %116 = vdwg.mxu0
    %v117 = vmin.f32 %v114, 20.0
    %v118 = vmul.f32 %v117, 1.442695
    %v119 = vpow.pop %v118
    %v120 = vadd.f32 %v119, 2.0
    %v121 = vmul.f32 %v119, %v120
    %v122 = vadd.f32 %v121, 2.0
    %v123 = vrcp.pop %v122
    %v124 = vmul.f32 %v121, %v123
    %v125 = vmul.f32 %v114, %v124
    %v126 = vld [vmem:[#allocation5 + $0x18] sm:$0xff]
    %v127 = vld [vmem:[#allocation5 + $0x20] sm:$0xff]
    %v128 = vld [vmem:[#allocation5 + $0x28] sm:$0xff]
    %v129 = vld [vmem:[#allocation5 + $0x30] sm:$0xff]
    %v130 = vld [vmem:[#allocation5 + $0x38] sm:$0xff]
    %v131 = vld [vmem:[#allocation5 + $0x40] sm:$0xff]
    %v132 = vld [vmem:[#allocation5 + $0x48] sm:$0xff]
    %v133 = vld [vmem:[#allocation5 + $0x50] sm:$0xff]
    %v134 = vld [vmem:[#allocation5 + $0x58] sm:$0xff]
    %v135 = vld [vmem:[#allocation5 + $0x60] sm:$0xff]
    %v136 = vld [vmem:[#allocation5 + $0x68] sm:$0xff]
    %v137 = vld [vmem:[#allocation5 + $0x70] sm:$0xff]
    %v138 = vld [vmem:[#allocation5 + $0x78] sm:$0xff]
    %v139 = vld [vmem:[#allocation5 + $0x80] sm:$0xff]
    %v140 = vld [vmem:[#allocation5 + $0x88] sm:$0xff]
    %v141 = vld [vmem:[#allocation5 + $0x90] sm:$0xff]
    %v142 = vlaneseq
    %v143 = vshrl.u32 %v142, 7
    %v144 = vsub.s32 0, %v143
    %v145 = vrot.slane %v39, %v144
    %146 = vmatprep.subr.mxu0 0.0
    %147 = vmatpush1.msra.mxu0 %v126
    %148 = vmatprep.subr.mxu0 0.0
    %149 = vmatpush1.msra.mxu0 %v127
    %150 = vmatprep.subr.mxu0 0.0
    %151 = vmatpush1.msra.mxu0 %v128
    %152 = vmatprep.subr.mxu0 0.0
    %153 = vmatpush1.msra.mxu0 %v129
    %154 = vmatprep.subr.mxu0 0.0
    %155 = vmatpush1.msra.mxu0 %v130
    %156 = vmatprep.subr.mxu0 0.0
    %157 = vmatpush1.msra.mxu0 %v131
    %158 = vmatprep.subr.mxu0 0.0
    %159 = vmatpush1.msra.mxu0 %v132
    %160 = vmatprep.subr.mxu0 0.0
    %161 = vmatpush1.msra.mxu0 %v133
    %162 = vmatprep.subr.mxu0 0.0
    %163 = vmatpush1.msra.mxu0 %v134
    %164 = vmatprep.subr.mxu0 0.0
    %165 = vmatpush1.msra.mxu0 %v135
    %166 = vmatprep.subr.mxu0 0.0
    %167 = vmatpush1.msra.mxu0 %v136
    %168 = vmatprep.subr.mxu0 0.0
    %169 = vmatpush1.msra.mxu0 %v137
    %170 = vmatprep.subr.mxu0 0.0
    %171 = vmatpush1.msra.mxu0 %v138
    %172 = vmatprep.subr.mxu0 0.0
    %173 = vmatpush1.msra.mxu0 %v139
    %174 = vmatprep.subr.mxu0 0.0
    %175 = vmatpush1.msra.mxu0 %v140
    %176 = vmatprep.subr.mxu0 0.0
    %177 = vmatpush1.msra.mxu0 %v141
    %178 = vmatprep.subr.mxu0 0.0
    %179 = vmatpush1.msra.mxu0 0.0
    %180 = vmatprep.subr.mxu0 0.0
    %181 = vmatpush1.msra.mxu0 0.0
    %182 = vmatprep.subr.mxu0 0.0
    %183 = vmatpush1.msra.mxu0 0.0
    %184 = vmatprep.subr.mxu0 0.0
    %185 = vmatpush1.msra.mxu0 0.0
    %186 = vmatprep.subr.mxu0 0.0
    %187 = vmatpush1.msra.mxu0 0.0
    %188 = vmatprep.subr.mxu0 0.0
    %189 = vmatpush1.msra.mxu0 0.0
    %190 = vmatprep.subr.mxu0 0.0
    %191 = vmatpush1.msra.mxu0 0.0
    %192 = vmatprep.subr.mxu0 0.0
    %193 = vmatpush1.msra.mxu0 0.0
    %194 = vmatprep.subr.mxu0 0.0
    %195 = vmatpush1.msra.mxu0 0.0
    %196 = vmatprep.subr.mxu0 0.0
    %197 = vmatpush1.msra.mxu0 0.0
    %198 = vmatprep.subr.mxu0 0.0
    %199 = vmatpush1.msra.mxu0 0.0
    %200 = vmatprep.subr.mxu0 0.0
    %201 = vmatpush1.msra.mxu0 0.0
    %202 = vmatprep.subr.mxu0 0.0
    %203 = vmatpush1.msra.mxu0 0.0
    %204 = vmatprep.subr.mxu0 0.0
    %205 = vmatpush1.msra.mxu0 0.0
    %206 = vmatprep.subr.mxu0 0.0
    %207 = vmatpush1.msra.mxu0 0.0
    %208 = vmatprep.subr.mxu0 0.0
    %209 = vmatpush1.msra.mxu0 0.0
    %210 = vmatprep.mubr.f32.mxu0 0.0
    %211 = vmatmul.mubr.f32.gmra.mrb[0].mxu0 %v125
    %v212 = vpop.f32.mrb[0].mxu0
    %v213 = vadd.f32 %v145, %v212
    %v214 = vpop.f32.mrb[0].mxu0
    %215 = vdwg.mxu0
    %v216 = vmin.f32 %v213, 20.0
    %v217 = vmul.f32 %v216, 1.442695
    %v218 = vpow.pop %v217
    %v219 = vadd.f32 %v218, 2.0
    %v220 = vmul.f32 %v218, %v219
    %v221 = vadd.f32 %v220, 2.0
    %v222 = vrcp.pop %v221
    %v223 = vmul.f32 %v220, %v222
    %v224 = vmul.f32 %v213, %v223
    %v225 = vld [vmem:[#allocation5 + $0x98] sm:$0xff]
    %v226 = vld [vmem:[#allocation5 + $0xa0] sm:$0xff]
    %v227 = vld [vmem:[#allocation5 + $0xa8] sm:$0xff]
    %v228 = vld [vmem:[#allocation5 + $0xb0] sm:$0xff]
    %v229 = vld [vmem:[#allocation5 + $0xb8] sm:$0xff]
    %v230 = vld [vmem:[#allocation5 + $0xc0] sm:$0xff]
    %v231 = vld [vmem:[#allocation5 + $0xc8] sm:$0xff]
    %v232 = vld [vmem:[#allocation5 + $0xd0] sm:$0xff]
    %v233 = vld [vmem:[#allocation5 + $0xd8] sm:$0xff]
    %v234 = vld [vmem:[#allocation5 + $0xe0] sm:$0xff]
    %v235 = vld [vmem:[#allocation5 + $0xe8] sm:$0xff]
    %v236 = vld [vmem:[#allocation5 + $0xf0] sm:$0xff]
    %v237 = vld [vmem:[#allocation5 + $0xf8] sm:$0xff]
    %v238 = vld [vmem:[#allocation5 + $0x100] sm:$0xff]
    %v239 = vld [vmem:[#allocation5 + $0x108] sm:$0xff]
    %v240 = vld [vmem:[#allocation5 + $0x110] sm:$0xff]
    %v241 = vlaneseq
    %v242 = vshrl.u32 %v241, 7
    %v243 = vsub.s32 1, %v242
    %v244 = vrot.slane %v39, %v243
    %245 = vmatprep.subr.mxu0 0.0
    %246 = vmatpush1.msra.mxu0 %v225
    %247 = vmatprep.subr.mxu0 0.0
    %248 = vmatpush1.msra.mxu0 %v226
    %249 = vmatprep.subr.mxu0 0.0
    %250 = vmatpush1.msra.mxu0 %v227
    %251 = vmatprep.subr.mxu0 0.0
    %252 = vmatpush1.msra.mxu0 %v228
    %253 = vmatprep.subr.mxu0 0.0
    %254 = vmatpush1.msra.mxu0 %v229
    %255 = vmatprep.subr.mxu0 0.0
    %256 = vmatpush1.msra.mxu0 %v230
    %257 = vmatprep.subr.mxu0 0.0
    %258 = vmatpush1.msra.mxu0 %v231
    %259 = vmatprep.subr.mxu0 0.0
    %260 = vmatpush1.msra.mxu0 %v232
    %261 = vmatprep.subr.mxu0 0.0
    %262 = vmatpush1.msra.mxu0 %v233
    %263 = vmatprep.subr.mxu0 0.0
    %264 = vmatpush1.msra.mxu0 %v234
    %265 = vmatprep.subr.mxu0 0.0
    %266 = vmatpush1.msra.mxu0 %v235
    %267 = vmatprep.subr.mxu0 0.0
    %268 = vmatpush1.msra.mxu0 %v236
    %269 = vmatprep.subr.mxu0 0.0
    %270 = vmatpush1.msra.mxu0 %v237
    %271 = vmatprep.subr.mxu0 0.0
    %272 = vmatpush1.msra.mxu0 %v238
    %273 = vmatprep.subr.mxu0 0.0
    %274 = vmatpush1.msra.mxu0 %v239
    %275 = vmatprep.subr.mxu0 0.0
    %276 = vmatpush1.msra.mxu0 %v240
    %277 = vmatprep.subr.mxu0 0.0
    %278 = vmatpush1.msra.mxu0 0.0
    %279 = vmatprep.subr.mxu0 0.0
    %280 = vmatpush1.msra.mxu0 0.0
    %281 = vmatprep.subr.mxu0 0.0
    %282 = vmatpush1.msra.mxu0 0.0
    %283 = vmatprep.subr.mxu0 0.0
    %284 = vmatpush1.msra.mxu0 0.0
    %285 = vmatprep.subr.mxu0 0.0
    %286 = vmatpush1.msra.mxu0 0.0
    %287 = vmatprep.subr.mxu0 0.0
    %288 = vmatpush1.msra.mxu0 0.0
    %289 = vmatprep.subr.mxu0 0.0
    %290 = vmatpush1.msra.mxu0 0.0
    %291 = vmatprep.subr.mxu0 0.0
    %292 = vmatpush1.msra.mxu0 0.0
    %293 = vmatprep.subr.mxu0 0.0
    %294 = vmatpush1.msra.mxu0 0.0
    %295 = vmatprep.subr.mxu0 0.0
    %296 = vmatpush1.msra.mxu0 0.0
    %297 = vmatprep.subr.mxu0 0.0
    %298 = vmatpush1.msra.mxu0 0.0
    %299 = vmatprep.subr.mxu0 0.0
    %300 = vmatpush1.msra.mxu0 0.0
    %301 = vmatprep.subr.mxu0 0.0
    %302 = vmatpush1.msra.mxu0 0.0
    %303 = vmatprep.subr.mxu0 0.0
    %304 = vmatpush1.msra.mxu0 0.0
    %305 = vmatprep.subr.mxu0 0.0
    %306 = vmatpush1.msra.mxu0 0.0
    %307 = vmatprep.subr.mxu0 0.0
    %308 = vmatpush1.msra.mxu0 0.0
    %309 = vmatprep.mubr.f32.mxu0 0.0
    %310 = vmatmul.mubr.f32.gmra.mrb[0].mxu0 %v224
    %v311 = vpop.f32.mrb[0].mxu0
    %v312 = vadd.f32 %v244, %v311
    %v313 = vpop.f32.mrb[0].mxu0
    %314 = vdwg.mxu0
    %v315 = vmin.f32 %v312, 20.0
    %v316 = vmul.f32 %v315, 1.442695
    %v317 = vpow.pop %v316
    %v318 = vadd.f32 %v317, 2.0
    %v319 = vmul.f32 %v317, %v318
    %v320 = vadd.f32 %v319, 2.0
    %v321 = vrcp.pop %v320
    %v322 = vmul.f32 %v319, %v321
    %v323 = vmul.f32 %v312, %v322
    %v324 = vld [vmem:[#allocation5 + $0x118] sm:$0xff]
    %v325 = vld [vmem:[#allocation5 + $0x120] sm:$0xff]
    %v326 = vld [vmem:[#allocation5 + $0x128] sm:$0xff]
    %v327 = vld [vmem:[#allocation5 + $0x130] sm:$0xff]
    %v328 = vld [vmem:[#allocation5 + $0x138] sm:$0xff]
    %v329 = vld [vmem:[#allocation5 + $0x140] sm:$0xff]
    %v330 = vld [vmem:[#allocation5 + $0x148] sm:$0xff]
    %v331 = vld [vmem:[#allocation5 + $0x150] sm:$0xff]
    %v332 = vld [vmem:[#allocation5 + $0x158] sm:$0xff]
    %v333 = vld [vmem:[#allocation5 + $0x160] sm:$0xff]
    %v334 = vld [vmem:[#allocation5 + $0x168] sm:$0xff]
    %v335 = vld [vmem:[#allocation5 + $0x170] sm:$0xff]
    %v336 = vld [vmem:[#allocation5 + $0x178] sm:$0xff]
    %v337 = vld [vmem:[#allocation5 + $0x180] sm:$0xff]
    %v338 = vld [vmem:[#allocation5 + $0x188] sm:$0xff]
    %v339 = vld [vmem:[#allocation5 + $0x190] sm:$0xff]
    %v340 = vlaneseq
    %v341 = vshrl.u32 %v340, 7
    %v342 = vsub.s32 2, %v341
    %v343 = vrot.slane %v39, %v342
    %344 = vmatprep.subr.mxu0 0.0
    %345 = vmatpush1.msra.mxu0 %v324
    %346 = vmatprep.subr.mxu0 0.0
    %347 = vmatpush1.msra.mxu0 %v325
    %348 = vmatprep.subr.mxu0 0.0
    %349 = vmatpush1.msra.mxu0 %v326
    %350 = vmatprep.subr.mxu0 0.0
    %351 = vmatpush1.msra.mxu0 %v327
    %352 = vmatprep.subr.mxu0 0.0
    %353 = vmatpush1.msra.mxu0 %v328
    %354 = vmatprep.subr.mxu0 0.0
    %355 = vmatpush1.msra.mxu0 %v329
    %356 = vmatprep.subr.mxu0 0.0
    %357 = vmatpush1.msra.mxu0 %v330
    %358 = vmatprep.subr.mxu0 0.0
    %359 = vmatpush1.msra.mxu0 %v331
    %360 = vmatprep.subr.mxu0 0.0
    %361 = vmatpush1.msra.mxu0 %v332
    %362 = vmatprep.subr.mxu0 0.0
    %363 = vmatpush1.msra.mxu0 %v333
    %364 = vmatprep.subr.mxu0 0.0
    %365 = vmatpush1.msra.mxu0 %v334
    %366 = vmatprep.subr.mxu0 0.0
    %367 = vmatpush1.msra.mxu0 %v335
    %368 = vmatprep.subr.mxu0 0.0
    %369 = vmatpush1.msra.mxu0 %v336
    %370 = vmatprep.subr.mxu0 0.0
    %371 = vmatpush1.msra.mxu0 %v337
    %372 = vmatprep.subr.mxu0 0.0
    %373 = vmatpush1.msra.mxu0 %v338
    %374 = vmatprep.subr.mxu0 0.0
    %375 = vmatpush1.msra.mxu0 %v339
    %376 = vmatprep.subr.mxu0 0.0
    %377 = vmatpush1.msra.mxu0 0.0
    %378 = vmatprep.subr.mxu0 0.0
    %379 = vmatpush1.msra.mxu0 0.0
    %380 = vmatprep.subr.mxu0 0.0
    %381 = vmatpush1.msra.mxu0 0.0
    %382 = vmatprep.subr.mxu0 0.0
    %383 = vmatpush1.msra.mxu0 0.0
    %384 = vmatprep.subr.mxu0 0.0
    %385 = vmatpush1.msra.mxu0 0.0
    %386 = vmatprep.subr.mxu0 0.0
    %387 = vmatpush1.msra.mxu0 0.0
    %388 = vmatprep.subr.mxu0 0.0
    %389 = vmatpush1.msra.mxu0 0.0
    %390 = vmatprep.subr.mxu0 0.0
    %391 = vmatpush1.msra.mxu0 0.0
    %392 = vmatprep.subr.mxu0 0.0
    %393 = vmatpush1.msra.mxu0 0.0
    %394 = vmatprep.subr.mxu0 0.0
    %395 = vmatpush1.msra.mxu0 0.0
    %396 = vmatprep.subr.mxu0 0.0
    %397 = vmatpush1.msra.mxu0 0.0
    %398 = vmatprep.subr.mxu0 0.0
    %399 = vmatpush1.msra.mxu0 0.0
    %400 = vmatprep.subr.mxu0 0.0
    %401 = vmatpush1.msra.mxu0 0.0
    %402 = vmatprep.subr.mxu0 0.0
    %403 = vmatpush1.msra.mxu0 0.0
    %404 = vmatprep.subr.mxu0 0.0
    %405 = vmatpush1.msra.mxu0 0.0
    %406 = vmatprep.subr.mxu0 0.0
    %407 = vmatpush1.msra.mxu0 0.0
    %408 = vmatprep.mubr.f32.mxu0 0.0
    %409 = vmatmul.mubr.f32.gmra.mrb[0].mxu0 %v323
    %v410 = vpop.f32.mrb[0].mxu0
    %v411 = vadd.f32 %v343, %v410
    %v412 = vpop.f32.mrb[0].mxu0
    %413 = vdwg.mxu0
    %414 = vst [vmem:[#allocation7] sm:$0xff] %v411
    // Predicated region
    $region18: #{tpu_custom_call.1} parent=1 // pred_check
      _
    $region19: #{tpu_custom_call.1} parent=1 // pred_check_branch
      %416 = sbr.rel (0) target = $region21
    $region20: #{tpu_custom_call.1} parent=1 // pred_region
      %s418 = ssub.s32 128, 128
      %419 = vsyncadd [#allocation4], %s418
      %s421 = sshll.u32 [#allocation7], 4
      %s422 = int_to_ptr.vmem [resolvable:$true] %s421
      %424 = dma.vmem_to_hbm [thread:$0]  %s422, 128, %s2, [#allocation4]
    $region21: #{tpu_custom_call.1} parent=1 // pred_fallthru
      _
    // Predicated region
    $region22: #{tpu_custom_call.1} parent=1 // pred_check
      _
    $region23: #{tpu_custom_call.1} parent=1 // pred_check_branch
      %426 = sbr.rel (0) target = $region25
    $region24: #{tpu_custom_call.1} parent=1 // pred_region
      %427 = dma.done [#allocation4], 128
    $region25: #{tpu_custom_call.1} parent=1 // pred_fallthru
      _
    %428 = vsyncpa [#allocation3], 1
    %429 = vsyncpa [#allocation6], 1
    %430 = vsyncpa [#allocation4], 1

</llo_original>
